<compile_context>
chip_gen: v6e
topology: v6e:2x2x1
jax: 0.10.0
libtpu: 0.0.40
codegen_flags: <defaults>
</compile_context>

<pallas_src>
import math

import jax
import jax.numpy as jnp
from jax import lax
from jax.experimental import pallas as pl
from jax.experimental.pallas import tpu as pltpu

_ROWS_PER_STORE = 256  # store chunk: (256, C) = 32*C/128 vregs (128 KiB @ C=128)


def _denoising_kernel(row_ref, o_ref):
    """row_ref: [1, C] pre-activated ELU(W+b) row, lane-dense (VMEM).
    o_ref:   [tile_r, C] output block. Pure broadcast-store."""
    tile_r, c = o_ref.shape
    chunk = min(_ROWS_PER_STORE, tile_r)
    block = jnp.broadcast_to(row_ref[...], (chunk, c)).astype(o_ref.dtype)

    n_full = tile_r // chunk
    rem = tile_r - n_full * chunk

    if n_full == 1 and rem == 0:
        o_ref[...] = block
    else:
        def body(r, carry):
            start = pl.multiple_of(r * chunk, chunk)
            o_ref[pl.ds(start, chunk), :] = block
            return carry

        lax.fori_loop(0, n_full, body, 0, unroll=(n_full <= 16))
        if rem:  # static trailing remainder (only when tile_r == full slab)
            o_ref[pl.ds(n_full * chunk, rem), :] = block[:rem, :]


def denoising_net_forward(input_list_stacked, weight, bias, *,
                          vmem_budget_bytes=4 << 20,
                          min_pallas_bytes=256 * 1024):
    """input_list_stacked: [L, B] (the L input_list tensors of shape [B],
    stacked). Only its shape/dtype matter -- matching zeros_like/ones_like in
    the PyTorch forward.  weight: [1, L] = nn.Linear(L, 1).weight,
    bias: [1] = nn.Linear(L, 1).bias.
    Returns [B, L] (== torch.cat(output_propensity_list, 1))."""
    L, B = input_list_stacked.shape
    out_dtype = jnp.promote_types(input_list_stacked.dtype, weight.dtype)
    itemsize = jnp.dtype(out_dtype).itemsize

    # ELU(W + b) computed once on L values in plain JAX (hoisted out of kernel).
    z = weight.reshape(L).astype(jnp.float32) + bias.reshape(()).astype(jnp.float32)
    elu_row = jnp.where(z > 0, z, jnp.expm1(z))  # [L], fp32, ELU(alpha=1)

    n_flat = B * L
    if n_flat * itemsize < min_pallas_bytes:
        # Launch overhead would dominate; let XLA broadcast/fuse it.
        return jnp.broadcast_to(elu_row.astype(out_dtype)[None, :], (B, L))

    # Lane-dense slab: C = lcm(L, 128) lanes; pad flat length to a multiple of C.
    C = (L * 128) // math.gcd(L, 128)
    R = pl.cdiv(n_flat, C)
    n_pad = R * C
    reps = C // L
    row = jnp.tile(elu_row.reshape(1, L), (1, reps)).astype(out_dtype)  # [1, C]

    # Row-tile from a VMEM byte budget (double-buffered output).
    bytes_per_row = C * itemsize
    budget_rows = max(8, ((vmem_budget_bytes // bytes_per_row) // 8) * 8)
    if R <= budget_rows:
        tile_r = R                                   # single full-extent block
    elif budget_rows >= _ROWS_PER_STORE:
        tile_r = (budget_rows // _ROWS_PER_STORE) * _ROWS_PER_STORE
    else:
        tile_r = budget_rows                         # multiple of 8
    grid = (pl.cdiv(R, tile_r),)

    vmem_limit = int(min(32 << 20,
                         max(16 << 20, 2 * tile_r * bytes_per_row + (2 << 20))))

    out = pl.pallas_call(
        _denoising_kernel,
        out_shape=jax.ShapeDtypeStruct((R, C), out_dtype),
        grid=grid,
        in_specs=[pl.BlockSpec((1, C), lambda i: (0, 0))],      # ELU row (VMEM)
        out_specs=pl.BlockSpec((tile_r, C), lambda i: (i, 0)),
        compiler_params=pltpu.CompilerParams(
            dimension_semantics=("parallel",),
            vmem_limit_bytes=vmem_limit),
        cost_estimate=pl.CostEstimate(
            flops=0, transcendentals=0,
            bytes_accessed=n_pad * itemsize + C * itemsize),
    )(row)

    # Row-major (R, C) flat index f holds elu_row[f % L] (since L | C), so the
    # first n_flat entries reshape exactly to [B, L].
    flat = out.reshape(-1)
    if n_pad != n_flat:
        flat = flat[:n_flat]   # ragged case only: one extra small copy
    return flat.reshape(B, L)


if __name__ == "__main__":
    key = jax.random.PRNGKey(0)
    k_x, k_w, k_b = jax.random.split(key, 3)

    L = 16  # list_size = input_vec_size
    # Deterministic nn.Linear(L, 1) params (PyTorch default U(-1/sqrt(L), 1/sqrt(L))).
    bound = 1.0 / (L ** 0.5)
    weight = jax.random.uniform(k_w, (1, L), jnp.float32, -bound, bound)
    bias = jax.random.uniform(k_b, (1,), jnp.float32, -bound, bound)

    # Plain-JAX reference row: ELU(W + b).
    z_ref = weight[0] + bias[0]
    elu_ref_row = jnp.where(z_ref > 0, z_ref, jnp.expm1(z_ref))

    def run_and_check(B, **kw):
        x = jax.random.normal(k_x, (L, B), dtype=jnp.float32)  # values unused
        out = jax.block_until_ready(denoising_net_forward(x, weight, bias, **kw))
        ref = jnp.broadcast_to(elu_ref_row[None, :], (B, L))
        assert out.shape == (B, L), out.shape
        assert out.dtype == jnp.float32, out.dtype
        assert jnp.allclose(out, ref, atol=1e-6, rtol=1e-6)

    run_and_check(8)                                   # tiny: XLA fast path
    run_and_check(8, min_pallas_bytes=0)               # tiny, forced Pallas (grid=(1,))
    run_and_check(1003, min_pallas_bytes=0)            # ragged flat length: pad + slice
    run_and_check(8192, vmem_budget_bytes=256 * 1024)  # multi-step grid + chunked stores

    print("KERNEL_OK")
</pallas_src>

<mosaic_0001>
module attributes {stable_mosaic.version = 11 : i64} {
  func.func @_denoising_kernel(%arg0: i32, %arg1: memref<1x128xf32, #tpu.memory_space<vmem>>, %arg2: memref<1x128xf32, #tpu.memory_space<vmem>>) attributes {dimension_semantics = [#tpu.dimension_semantics<parallel>], iteration_bounds = array<i64: 1>, scalar_prefetch = 0 : i64, scratch_operands = 0 : i64, tpu.core_type = #tpu.core_type<tc>, window_params = [{pipeline_mode = #tpu.pipeline_mode<synchronous>, transform_indices = @transform_0, window_bounds = array<i64: 1, 128>}, {transform_indices = @transform_1, window_bounds = array<i64: 1, 128>}]} {
    %c0 = arith.constant 0 : index
    %c0_0 = arith.constant 0 : index
    %0 = vector.load %arg1[%c0, %c0_0] : memref<1x128xf32, #tpu.memory_space<vmem>>, vector<1x128xf32>
    %c0_1 = arith.constant 0 : index
    %c0_2 = arith.constant 0 : index
    %1 = vector.load %arg2[%c0_1, %c0_2] : memref<1x128xf32, #tpu.memory_space<vmem>>, vector<1x128xf32>
    tpu.vector_store %arg2[%c0_1, %c0_2], %0 {strides = array<i32>} : memref<1x128xf32, #tpu.memory_space<vmem>>, vector<1x128xf32>,
    return
  }
  func.func @transform_0(%arg0: i32) -> (i32, i32) {
    %c0_i32 = arith.constant 0 : i32
    %c0_i32_0 = arith.constant 0 : i32
    %c0_i32_1 = arith.constant 0 : i32
    return %c0_i32, %c0_i32_0 : i32, i32
  }
  func.func @transform_1(%arg0: i32) -> (i32, i32) {
    %c0_i32 = arith.constant 0 : i32
    %c0_i32_0 = arith.constant 0 : i32
    return %arg0, %c0_i32 : i32, i32
  }
}

</mosaic_0001>

<llo_original>
// kernel: tpu_custom_call.1
$region0: #{tpu_custom_call.1}
  #allocation0 [shape = 'u32[]', space=smem, size = 0x4, offset = 0x4, fixed_abs, tag = 'smem constant byte address 0x4 - core index']
  #allocation1 [shape = 'u32[144,128]{1,0:T(1,128)}', space=vmem, size = 0x12000, scoped, tag = 'internal scratch']
  %s0 = inlined_call_operand.hbm [shape: f32[1,128], index: 0, kind: input, shape index: {}]
  %s1 = inlined_call_operand.hbm [shape: f32[1,128], index: 1, kind: output, shape index: {}]
  %s2 = sld [smem:[#allocation0]]
  $region18: #{tpu_custom_call.1} parent=0
    _
  %s4 = ssub.s32 1, %s2
  %s5 = scalar_select 0, %s4, %s2
  $region1: #{tpu_custom_call.1} parent=0
    #allocation2 [shape = 'u8[512]{0}', space=vmem, size = 0x400, scoped, tag = 'input window, operand 0, single buffered']
    #allocation3 [shape = 's32[1]{0}', space=sflag, size = 0x4, scoped, tag = 'scoped memory for tpu_custom_call.1']
    #allocation4 [shape = 's32[1]{0}', space=sflag, size = 0x4, scoped, tag = 'scoped memory for tpu_custom_call.1']
    #allocation5 [shape = 'u8[512]{0}', space=vmem, size = 0x400, scoped, tag = 'output window, operand 0, single buffered']
    %6 = vsyncpa [#allocation3], 0
    %7 = vsyncpa [#allocation4], 0
    // Predicated region
    $region2: #{tpu_custom_call.1} parent=1 // pred_check
      _
    $region3: #{tpu_custom_call.1} parent=1 // pred_check_branch
      %9 = sbr.rel (0) target = $region5
    $region4: #{tpu_custom_call.1} parent=1 // pred_region
      %s11 = ssub.s32 16, 16
      %12 = vsyncadd [#allocation3], %s11
      %s14 = sshll.u32 [#allocation2], 4
      %s15 = int_to_ptr.vmem [resolvable:$true] %s14
      %17 = dma.hbm_to_vmem [thread:$0]  %s0, 16, %s15, [#allocation3]
    $region5: #{tpu_custom_call.1} parent=1 // pred_fallthru
      _
    // Predicated region
    $region6: #{tpu_custom_call.1} parent=1 // pred_check
      _
    $region7: #{tpu_custom_call.1} parent=1 // pred_check_branch
      %19 = sbr.rel (0) target = $region9
    $region8: #{tpu_custom_call.1} parent=1 // pred_region
      %20 = dma.done [#allocation3], 16
    $region9: #{tpu_custom_call.1} parent=1 // pred_fallthru
      _
    %v21 = vld [vmem:[#allocation2] sm:$0x1]
    %22 = vst [vmem:[#allocation5] sm:$0x1] %v21
    // Predicated region
    $region10: #{tpu_custom_call.1} parent=1 // pred_check
      _
    $region11: #{tpu_custom_call.1} parent=1 // pred_check_branch
      %24 = sbr.rel (0) target = $region13
    $region12: #{tpu_custom_call.1} parent=1 // pred_region
      %s26 = ssub.s32 16, 16
      %27 = vsyncadd [#allocation4], %s26
      %s29 = sshll.u32 [#allocation5], 4
      %s30 = int_to_ptr.vmem [resolvable:$true] %s29
      %32 = dma.vmem_to_hbm [thread:$0]  %s30, 16, %s1, [#allocation4]
    $region13: #{tpu_custom_call.1} parent=1 // pred_fallthru
      _
    // Predicated region
    $region14: #{tpu_custom_call.1} parent=1 // pred_check
      _
    $region15: #{tpu_custom_call.1} parent=1 // pred_check_branch
      %34 = sbr.rel (0) target = $region17
    $region16: #{tpu_custom_call.1} parent=1 // pred_region
      %35 = dma.done [#allocation4], 16
    $region17: #{tpu_custom_call.1} parent=1 // pred_fallthru
      _
    %36 = vsyncpa [#allocation3], 1
    %37 = vsyncpa [#allocation4], 1

</llo_original>
